<compile_context>
chip_gen: v5e
topology: v5e:2x2
jax: 0.10.0
libtpu: 0.0.40
codegen_flags: <defaults>
</compile_context>

<pallas_src>
import jax
import jax.numpy as jnp
from jax.experimental import pallas as pl
from jax.experimental.pallas import tpu as pltpu


def _make_bce_kernel(tm, rows_valid, tiles_per_core):
    """BCE-with-logits accumulated into a resident VMEM scratch accumulator."""

    def kernel(x_ref, y_ref, out_ref, acc_ref):
        p = pl.program_id(0)      # parallel (per-core) axis
        i = pl.program_id(1)      # sequential reduction axis

        @pl.when(i == 0)
        def _init():
            acc_ref[...] = jnp.zeros_like(acc_ref)

        x = x_ref[...].astype(jnp.float32)
        y_raw = y_ref[...]
        if y_raw.dtype == jnp.bool_:
            y = jnp.where(y_raw, 1.0, 0.0).astype(jnp.float32)
        else:
            y = y_raw.astype(jnp.float32)

        # Numerically stable BCE with logits (same formula PyTorch uses):
        #   loss = max(x, 0) - x*y + log1p(exp(-|x|))
        loss = jnp.maximum(x, 0.0) - x * y + jnp.log1p(jnp.exp(-jnp.abs(x)))

        blk = p * tiles_per_core + i          # logical (unclamped) tile index
        row_start = blk * tm
        is_full = row_start + tm <= rows_valid

        @pl.when(is_full)
        def _accumulate_full():
            acc_ref[...] += loss

        @pl.when(jnp.logical_not(is_full))
        def _accumulate_masked():
            # Only edge / dummy tiles pay for this; (tm, 1) iota broadcasts
            # across lanes instead of materializing a (tm, cols) int32 tile.
            if tm == 1:
                acc_ref[...] += jnp.where(row_start < rows_valid, loss, 0.0)
            else:
                row = row_start + jax.lax.broadcasted_iota(jnp.int32, (tm, 1), 0)
                acc_ref[...] += jnp.where(row < rows_valid, loss, 0.0)

        @pl.when(i == pl.num_programs(1) - 1)
        def _finalize():
            # Once-per-core cross-lane reduce (XLU is idle otherwise) -> tiny
            # (1, 1, 1) output block instead of a multi-MiB writeback.
            partial = jnp.sum(acc_ref[...], axis=0, keepdims=True)   # (1, cols)
            total = jnp.sum(partial, axis=1, keepdims=True)          # (1, 1)
            out_ref[...] = total.reshape(1, 1, 1)

    return kernel


def _num_core_splits():
    """TensorCores per JAX device (best effort): 2 on v4/v5p/TPU7x, else 1."""
    try:
        kind = jax.devices()[0].device_kind.lower()
    except Exception:
        return 2  # default to 2: harmless on single-core chips, wins on v7x
    if any(tag in kind for tag in ("lite", "v5e", "v6e", "v2", "v3")):
        return 1
    return 2


def tbce_loss(pred_logits, truths, weight=None):
    """Pallas implementation of TBCELoss.forward.

    pred_logits: (B, T, H); truths: (B, T, H), any numeric or bool dtype.
    weight: accepted for API parity but unused (matches the reference module).
    Returns the sum over all elements of BCE-with-logits(pred_logits, truths).
    """
    del weight  # cast to float but never used in the reference loss
    B, T, H = pred_logits.shape
    n = B * T * H

    # Lane-dense view: largest multiple-of-128 width that tiles the flat stream.
    cols = None
    for cand in (1024, 512, 256, 128):
        if n % cand == 0:
            cols = cand
            break
    if cols is None:
        # TODO(synk): when n % 128 != 0 there is no zero-copy lane-dense
        # reshape; fall back to the natural (B*T, H) layout (last dim equals
        # the full array dim, so it compiles, just with <100% lane occupancy).
        cols = H
    rows = n // cols

    x = pred_logits.reshape(rows, cols)    # free row-major reshape, no copy
    y = truths.reshape(rows, cols)         # bool passes straight through

    # Row tile: ~4 MiB per f32-equivalent input block (amortizes per-step
    # overhead; 2 inputs x 2 buffers + acc stays ~20 MiB, under every chip's
    # VMEM budget).
    budget_rows = max(8, ((4 * 1024 * 1024) // (cols * 4)) // 8 * 8)
    tm = rows if rows <= budget_rows else budget_rows
    tiles_total = -(-rows // tm)

    # Split the tile range across TensorCores (only where >1 TC exists).
    num_splits = 1 if tiles_total < 2 else _num_core_splits()
    tiles_per_core = -(-tiles_total // num_splits)

    if num_splits * tiles_per_core == tiles_total:
        def in_map(p, i):
            return (p * tiles_per_core + i, 0)
    else:
        last_blk = tiles_total - 1

        def in_map(p, i):
            # Clamp dummy trailing tiles onto a valid block; the in-kernel row
            # mask zeroes their contribution (mask uses the unclamped index).
            return (jnp.minimum(p * tiles_per_core + i, last_blk), 0)

    # Explicit VMEM accounting: double-buffered inputs + resident accumulator.
    x_bytes = tm * cols * jnp.dtype(x.dtype).itemsize
    y_bytes = tm * cols * jnp.dtype(y.dtype).itemsize
    acc_bytes = tm * cols * 4
    need = 2 * x_bytes + 2 * y_bytes + acc_bytes + (1 << 20)
    vmem_limit = int(min(max(need, 32 * 1024 * 1024), 48 * 1024 * 1024))

    out = pl.pallas_call(
        _make_bce_kernel(tm, rows, tiles_per_core),
        out_shape=jax.ShapeDtypeStruct((num_splits, 1, 1), jnp.float32),
        grid_spec=pltpu.PrefetchScalarGridSpec(
            num_scalar_prefetch=0,
            grid=(num_splits, tiles_per_core),
            in_specs=[
                pl.BlockSpec((tm, cols), in_map),
                pl.BlockSpec((tm, cols), in_map),
            ],
            out_specs=pl.BlockSpec((1, 1, 1), lambda p, i: (p, 0, 0)),
            scratch_shapes=[pltpu.VMEM((tm, cols), jnp.float32)],
        ),
        compiler_params=pltpu.CompilerParams(
            dimension_semantics=("parallel", "arbitrary"),
            vmem_limit_bytes=vmem_limit,
        ),
    )(x, y)

    # Tiny final reduction over <= num_splits scalar partials.
    return jnp.sum(out)


def _reference(pred_logits, truths):
    x = pred_logits.astype(jnp.float32)
    y = truths.astype(jnp.float32)
    loss = jnp.maximum(x, 0.0) - x * y + jnp.log1p(jnp.exp(-jnp.abs(x)))
    return jnp.sum(loss)


if __name__ == "__main__":
    key = jax.random.PRNGKey(0)
    k1, k2, k3 = jax.random.split(key, 3)

    B, T, H = 2, 8, 32
    pred_logits = jax.random.normal(k1, (B, T, H), dtype=jnp.float32)
    truths = jax.random.bernoulli(k2, 0.5, (B, T, H)).astype(jnp.float32)
    weight = jax.random.uniform(k3, (B, T, H), dtype=jnp.float32)  # unused, per reference

    out = tbce_loss(pred_logits, truths, weight)
    out = jax.block_until_ready(out)

    ref = jax.block_until_ready(_reference(pred_logits, truths))
    assert jnp.allclose(out, ref, rtol=1e-5, atol=1e-3), (out, ref)

    print("KERNEL_OK")
</pallas_src>

<mosaic_0001>
module attributes {stable_mosaic.version = 11 : i64} {
  func.func @kernel(%arg0: i32, %arg1: i32, %arg2: memref<1x512xf32, #tpu.memory_space<vmem>>, %arg3: memref<1x512xf32, #tpu.memory_space<vmem>>, %arg4: memref<1x1x1xf32, #tpu.memory_space<vmem>>, %arg5: memref<1x512xf32, #tpu.memory_space<vmem>>) attributes {dimension_semantics = [#tpu.dimension_semantics<parallel>, #tpu.dimension_semantics<arbitrary>], iteration_bounds = array<i64: 1, 1>, scalar_prefetch = 0 : i64, scratch_operands = 1 : i64, tpu.core_type = #tpu.core_type<tc>, window_params = [{transform_indices = @transform_0, window_bounds = array<i64: 1, 512>}, {transform_indices = @transform_1, window_bounds = array<i64: 1, 512>}, {transform_indices = @transform_2, window_bounds = array<i64: 1, 1, 1>}]} {
    %c0_i32 = arith.constant 0 : i32
    %0 = arith.cmpi eq, %arg1, %c0_i32 : i32
    %1 = arith.extui %0 : i1 to i32
    %c0_i32_0 = arith.constant 0 : i32
    %2 = arith.cmpi ne, %1, %c0_i32_0 : i32
    scf.if %2 {
      %cst_12 = arith.constant 0.000000e+00 : f32
      %28 = vector.broadcast %cst_12 : f32 to vector<1x512xf32>
      %c0_13 = arith.constant 0 : index
      %c0_14 = arith.constant 0 : index
      %29 = vector.load %arg5[%c0_13, %c0_14] : memref<1x512xf32, #tpu.memory_space<vmem>>, vector<1x512xf32>
      tpu.vector_store %arg5[%c0_13, %c0_14], %28 {strides = array<i32>} : memref<1x512xf32, #tpu.memory_space<vmem>>, vector<1x512xf32>,
    } else {
    }
    %c0 = arith.constant 0 : index
    %c0_1 = arith.constant 0 : index
    %3 = vector.load %arg2[%c0, %c0_1] : memref<1x512xf32, #tpu.memory_space<vmem>>, vector<1x512xf32>
    %c0_2 = arith.constant 0 : index
    %c0_3 = arith.constant 0 : index
    %4 = vector.load %arg3[%c0_2, %c0_3] : memref<1x512xf32, #tpu.memory_space<vmem>>, vector<1x512xf32>
    %cst = arith.constant 0.000000e+00 : f32
    %5 = vector.broadcast %cst : f32 to vector<1x512xf32>
    %6 = arith.maximumf %3, %5 : vector<1x512xf32>
    %7 = arith.mulf %3, %4 : vector<1x512xf32>
    %8 = arith.subf %6, %7 : vector<1x512xf32>
    %9 = math.absf %3 : vector<1x512xf32>
    %cst_4 = arith.constant 0.000000e+00 : f32
    %10 = vector.broadcast %cst_4 : f32 to vector<1x512xf32>
    %11 = arith.subf %10, %9 : vector<1x512xf32>
    %12 = math.exp %11 : vector<1x512xf32>
    %13 = math.log1p %12 : vector<1x512xf32>
    %14 = arith.addf %8, %13 : vector<1x512xf32>
    %c1_i32 = arith.constant 1 : i32
    %15 = arith.muli %arg0, %c1_i32 : i32
    %16 = arith.addi %15, %arg1 : i32
    %c1_i32_5 = arith.constant 1 : i32
    %17 = arith.muli %16, %c1_i32_5 : i32
    %c1_i32_6 = arith.constant 1 : i32
    %18 = arith.addi %17, %c1_i32_6 : i32
    %c1_i32_7 = arith.constant 1 : i32
    %19 = arith.cmpi sle, %18, %c1_i32_7 : i32
    %20 = arith.extui %19 : i1 to i32
    %c0_i32_8 = arith.constant 0 : i32
    %21 = arith.cmpi ne, %20, %c0_i32_8 : i32
    scf.if %21 {
      %c0_12 = arith.constant 0 : index
      %c0_13 = arith.constant 0 : index
      %28 = vector.load %arg5[%c0_12, %c0_13] : memref<1x512xf32, #tpu.memory_space<vmem>>, vector<1x512xf32>
      %29 = arith.addf %28, %14 : vector<1x512xf32>
      %c0_14 = arith.constant 0 : index
      %c0_15 = arith.constant 0 : index
      %30 = vector.load %arg5[%c0_14, %c0_15] : memref<1x512xf32, #tpu.memory_space<vmem>>, vector<1x512xf32>
      tpu.vector_store %arg5[%c0_14, %c0_15], %29 {strides = array<i32>} : memref<1x512xf32, #tpu.memory_space<vmem>>, vector<1x512xf32>,
    } else {
    }
    %true = arith.constant true
    %22 = arith.xori %19, %true : i1
    %23 = arith.extui %22 : i1 to i32
    %c0_i32_9 = arith.constant 0 : i32
    %24 = arith.cmpi ne, %23, %c0_i32_9 : i32
    scf.if %24 {
      %c0_12 = arith.constant 0 : index
      %c0_13 = arith.constant 0 : index
      %28 = vector.load %arg5[%c0_12, %c0_13] : memref<1x512xf32, #tpu.memory_space<vmem>>, vector<1x512xf32>
      %c1_i32_14 = arith.constant 1 : i32
      %29 = arith.cmpi slt, %17, %c1_i32_14 : i32
      %cst_15 = arith.constant 0.000000e+00 : f32
      %30 = vector.broadcast %cst_15 : f32 to vector<1x512xf32>
      %31 = arith.select %29, %14, %30 : vector<1x512xf32>
      %32 = arith.addf %28, %31 : vector<1x512xf32>
      %c0_16 = arith.constant 0 : index
      %c0_17 = arith.constant 0 : index
      %33 = vector.load %arg5[%c0_16, %c0_17] : memref<1x512xf32, #tpu.memory_space<vmem>>, vector<1x512xf32>
      tpu.vector_store %arg5[%c0_16, %c0_17], %32 {strides = array<i32>} : memref<1x512xf32, #tpu.memory_space<vmem>>, vector<1x512xf32>,
    } else {
    }
    %c0_i32_10 = arith.constant 0 : i32
    %25 = arith.cmpi eq, %arg1, %c0_i32_10 : i32
    %26 = arith.extui %25 : i1 to i32
    %c0_i32_11 = arith.constant 0 : i32
    %27 = arith.cmpi ne, %26, %c0_i32_11 : i32
    scf.if %27 {
      %c0_12 = arith.constant 0 : index
      %c0_13 = arith.constant 0 : index
      %28 = vector.load %arg5[%c0_12, %c0_13] : memref<1x512xf32, #tpu.memory_space<vmem>>, vector<1x512xf32>
      %cst_14 = arith.constant dense<0.000000e+00> : vector<512xf32>
      %29 = vector.multi_reduction <add>, %28, %cst_14 [0] : vector<1x512xf32> to vector<512xf32>
      %30 = vector.shape_cast %29 : vector<512xf32> to vector<1x512xf32>
      %cst_15 = arith.constant dense<0.000000e+00> : vector<1xf32>
      %31 = vector.multi_reduction <add>, %30, %cst_15 [1] : vector<1x512xf32> to vector<1xf32>
      %32 = vector.shape_cast %31 : vector<1xf32> to vector<1x1xf32>
      %33 = vector.shape_cast %32 : vector<1x1xf32> to vector<1x1x1xf32>
      %c0_16 = arith.constant 0 : index
      %c0_17 = arith.constant 0 : index
      %c0_18 = arith.constant 0 : index
      %34 = vector.load %arg4[%c0_16, %c0_17, %c0_18] : memref<1x1x1xf32, #tpu.memory_space<vmem>>, vector<1x1x1xf32>
      tpu.vector_store %arg4[%c0_16, %c0_17, %c0_18], %33 {strides = array<i32>} : memref<1x1x1xf32, #tpu.memory_space<vmem>>, vector<1x1x1xf32>,
    } else {
    }
    return
  }
  func.func @transform_0(%arg0: i32, %arg1: i32) -> (i32, i32) {
    %c1_i32 = arith.constant 1 : i32
    %0 = arith.muli %arg0, %c1_i32 : i32
    %1 = arith.addi %0, %arg1 : i32
    %c0_i32 = arith.constant 0 : i32
    %c0_i32_0 = arith.constant 0 : i32
    return %1, %c0_i32 : i32, i32
  }
  func.func @transform_1(%arg0: i32, %arg1: i32) -> (i32, i32) {
    %c1_i32 = arith.constant 1 : i32
    %0 = arith.muli %arg0, %c1_i32 : i32
    %1 = arith.addi %0, %arg1 : i32
    %c0_i32 = arith.constant 0 : i32
    %c0_i32_0 = arith.constant 0 : i32
    return %1, %c0_i32 : i32, i32
  }
  func.func @transform_2(%arg0: i32, %arg1: i32) -> (i32, i32, i32) {
    %c0_i32 = arith.constant 0 : i32
    %c0_i32_0 = arith.constant 0 : i32
    %c0_i32_1 = arith.constant 0 : i32
    return %arg0, %c0_i32, %c0_i32_0 : i32, i32, i32
  }
}

</mosaic_0001>

<llo_original>
// kernel: tpu_custom_call.1
$region0: #{tpu_custom_call.1}
  #allocation0 [shape = 'u32[]', space=smem, size = 0x4, offset = 0x4, fixed_abs, tag = 'smem constant byte address 0x4 - core index']
  #allocation1 [shape = 'u32[72,128]{1,0:T(1,128)}', space=vmem, size = 0x9000, scoped, tag = 'internal scratch']
  #allocation2 [shape = 'f32[1,512]{1,0:T(1,128)}', space=vmem, size = 0x800, scoped, tag = 'scratch operand']
  %s0 = inlined_call_operand.hbm [shape: f32[1,512], index: 0, kind: input, shape index: {}]
  %s1 = inlined_call_operand.hbm [shape: f32[1,512], index: 1, kind: input, shape index: {}]
  %s2 = inlined_call_operand.hbm [shape: f32[1,1,1], index: 2, kind: output, shape index: {}]
  %s3 = sld [smem:[#allocation0]]
  $region42: #{tpu_custom_call.1} parent=0
    _
  %s5 = ssub.s32 1, %s3
  %s6 = scalar_select 0, %s5, %s3
  $region1: #{tpu_custom_call.1} parent=0
    #allocation3 [shape = 'u8[2048]{0}', space=vmem, size = 0x800, scoped, tag = 'input window, operand 0, single buffered']
    #allocation4 [shape = 's32[1]{0}', space=sflag, size = 0x4, scoped, tag = 'scoped memory for tpu_custom_call.1']
    #allocation5 [shape = 's32[1]{0}', space=sflag, size = 0x4, scoped, tag = 'scoped memory for tpu_custom_call.1']
    #allocation6 [shape = 'u8[2048]{0}', space=vmem, size = 0x800, scoped, tag = 'input window, operand 1, single buffered']
    #allocation7 [shape = 's32[1]{0}', space=sflag, size = 0x4, scoped, tag = 'scoped memory for tpu_custom_call.1']
    #allocation8 [shape = 'u8[512]{0}', space=vmem, size = 0x400, scoped, tag = 'output window, operand 0, single buffered']
    %7 = vsyncpa [#allocation4], 0
    %8 = vsyncpa [#allocation7], 0
    %9 = vsyncpa [#allocation5], 0
    // Predicated region
    $region2: #{tpu_custom_call.1} parent=1 // pred_check
      _
    $region3: #{tpu_custom_call.1} parent=1 // pred_check_branch
      %11 = sbr.rel (0) target = $region5
    $region4: #{tpu_custom_call.1} parent=1 // pred_region
      %s12 = sadd.s32 0, 0
      %14 = vsyncadd [#allocation4], 0
      %s15 = smul.addr %s12, 4
      %s16 = scalar_lea.hbm %s0, %s15
      %s18 = sshll.u32 %s16, 4
      %s19 = int_to_ptr.hbm [resolvable:$true] %s18
      %s20 = sshll.u32 [#allocation3], 4
      %s21 = int_to_ptr.vmem [resolvable:$true] %s20
      %23 = dma.hbm_to_vmem [thread:$0]  %s19, 64, %s21, [#allocation4]
    $region5: #{tpu_custom_call.1} parent=1 // pred_fallthru
      _
    // Predicated region
    $region6: #{tpu_custom_call.1} parent=1 // pred_check
      _
    $region7: #{tpu_custom_call.1} parent=1 // pred_check_branch
      %25 = sbr.rel (0) target = $region9
    $region8: #{tpu_custom_call.1} parent=1 // pred_region
      %s26 = sadd.s32 0, 0
      %28 = vsyncadd [#allocation7], 0
      %s29 = smul.addr %s26, 4
      %s30 = scalar_lea.hbm %s1, %s29
      %s32 = sshll.u32 %s30, 4
      %s33 = int_to_ptr.hbm [resolvable:$true] %s32
      %s34 = sshll.u32 [#allocation6], 4
      %s35 = int_to_ptr.vmem [resolvable:$true] %s34
      %37 = dma.hbm_to_vmem [thread:$0]  %s33, 64, %s35, [#allocation7]
    $region9: #{tpu_custom_call.1} parent=1 // pred_fallthru
      _
    // Predicated region
    $region10: #{tpu_custom_call.1} parent=1 // pred_check
      _
    $region11: #{tpu_custom_call.1} parent=1 // pred_check_branch
      %39 = sbr.rel (0) target = $region13
    $region12: #{tpu_custom_call.1} parent=1 // pred_region
      %41 = dma.done [#allocation4], 64
    $region13: #{tpu_custom_call.1} parent=1 // pred_fallthru
      _
    // Predicated region
    $region14: #{tpu_custom_call.1} parent=1 // pred_check
      _
    $region15: #{tpu_custom_call.1} parent=1 // pred_check_branch
      %43 = sbr.rel (0) target = $region17
    $region16: #{tpu_custom_call.1} parent=1 // pred_region
      %45 = dma.done [#allocation7], 64
    $region17: #{tpu_custom_call.1} parent=1 // pred_fallthru
      _
    %s46 = sadd.s32 0, 0
    %s47 = sadd.s32 0, 0
    %p48 = scmp.eq.s32.totalorder 0, 0
    // Predicated region
    $region18: #{tpu_custom_call.1} parent=1 // pred_check
      %p49 = pneg %p48
    $region19: #{tpu_custom_call.1} parent=1 // pred_check_branch
      %51 = sbr.rel (%p49) target = $region21
    $region20: #{tpu_custom_call.1} parent=1 // pred_region
      %v52 = vlaneseq
      %vm53 = vcmp.ge.s32.totalorder %v52, 0
      %vm54 = vcmp.lt.s32.totalorder %v52, 512
      %vm55 = vmand %vm53, %vm54
      %56 = vst.msk [vmem:[#allocation2] sm:$0xf] %vm55, 0.0
    $region21: #{tpu_custom_call.1} parent=1 // pred_fallthru
      _
    %v57 = vld [vmem:[#allocation3] sm:$0xf]
    %v58 = vld [vmem:[#allocation6] sm:$0xf]
    %v59 = vmax.f32 %v57, 0.0
    %v60 = vmul.f32 %v57, %v58
    %v61 = vsub.f32 %v59, %v60
    %v62 = vand.u32 2147483647, %v57
    %v63 = vsub.f32 0.0, %v62
    %v64 = vmul.f32 %v63, 1.442695
    %v65 = vpow.pop %v64
    %v66 = vadd.f32 %v65, 1.0
    %v67 = vlog2.pop %v66
    %v68 = vmul.f32 %v67, 0.6931472
    %v69 = vmul.f32 -0.5, %v65
    %v70 = vadd.f32 %v69, 1.0
    %v71 = vmul.f32 %v70, %v65
    %v72 = vand.u32 2147483647, %v65
    %vm73 = vcmp.lt.f32.partialorder %v72, 0.0004427343
    %v74 = vsel %vm73, %v71, %v68
    %v75 = vadd.f32 %v61, %v74
    %s76 = sadd.s32 0, 0
    %s77 = sadd.s32 %s76, 1
    %p78 = scmp.le.s32.totalorder %s77, 1
    // Predicated region
    $region22: #{tpu_custom_call.1} parent=1 // pred_check
      %p79 = pneg %p78
    $region23: #{tpu_custom_call.1} parent=1 // pred_check_branch
      %81 = sbr.rel (%p79) target = $region25
    $region24: #{tpu_custom_call.1} parent=1 // pred_region
      %v82 = vld [vmem:[#allocation2] sm:$0xf]
      %v83 = vadd.f32 %v82, %v75
      %v84 = vlaneseq
      %vm85 = vcmp.ge.s32.totalorder %v84, 0
      %vm86 = vcmp.lt.s32.totalorder %v84, 512
      %vm87 = vmand %vm85, %vm86
      %88 = vst.msk [vmem:[#allocation2] sm:$0xf] %vm87, %v83
    $region25: #{tpu_custom_call.1} parent=1 // pred_fallthru
      _
    %p89 = scmp.gt.s32.totalorder %s77, 1
    // Predicated region
    $region26: #{tpu_custom_call.1} parent=1 // pred_check
      %p90 = pneg %p89
    $region27: #{tpu_custom_call.1} parent=1 // pred_check_branch
      %92 = sbr.rel (%p90) target = $region29
    $region28: #{tpu_custom_call.1} parent=1 // pred_region
      %v93 = vld [vmem:[#allocation2] sm:$0xf]
      %p94 = scmp.lt.s32.totalorder %s76, 1
      %s95 = scalar_select %p94, 1, 0
      %v96 = vstv %s95
      %vm97 = vcmp.eq.s32.totalorder %v96, 1
      %v98 = vsel %vm97, %v75, 0.0
      %v99 = vadd.f32 %v93, %v98
      %v100 = vlaneseq
      %vm101 = vcmp.ge.s32.totalorder %v100, 0
      %vm102 = vcmp.lt.s32.totalorder %v100, 512
      %vm103 = vmand %vm101, %vm102
      %104 = vst.msk [vmem:[#allocation2] sm:$0xf] %vm103, %v99
    $region29: #{tpu_custom_call.1} parent=1 // pred_fallthru
      _
    // Predicated region
    $region30: #{tpu_custom_call.1} parent=1 // pred_check
      %p105 = pneg %p48
    $region31: #{tpu_custom_call.1} parent=1 // pred_check_branch
      %107 = sbr.rel (%p105) target = $region33
    $region32: #{tpu_custom_call.1} parent=1 // pred_region
      %v108 = vld [vmem:[#allocation2] sm:$0xf]
      %v109 = vadd.f32 %v108, 0.0
      %v111 = vperm.slane %v109, 0
      %v112 = vperm.slane %v109, 1
      %v113 = vperm.slane %v109, 2
      %v114 = vperm.slane %v109, 3
      %vm119 = vcmask 1040384
      %v120 = vsel %vm119, %v111, 0.0
      %v121 = vsel %vm119, %v112, 0.0
      %v122 = vadd.f32 %v120, %v121
      %v123 = vsel %vm119, %v113, 0.0
      %v124 = vadd.f32 %v122, %v123
      %v125 = vsel %vm119, %v114, 0.0
      %v126 = vadd.f32 %v124, %v125
      %127 = vadd.xlane.f32.xlu0 %v126
      %v128 = vpop.xlane.xlu0 %127
      %vm129 = vcmask 0
      %130 = vst.msk [vmem:[#allocation8] sm:$0x1] %vm129, %v128
    $region33: #{tpu_custom_call.1} parent=1 // pred_fallthru
      _
    // Predicated region
    $region34: #{tpu_custom_call.1} parent=1 // pred_check
      _
    $region35: #{tpu_custom_call.1} parent=1 // pred_check_branch
      %132 = sbr.rel (0) target = $region37
    $region36: #{tpu_custom_call.1} parent=1 // pred_region
      %134 = vsyncadd [#allocation5], 0
      %s136 = sshll.u32 [#allocation8], 4
      %s137 = int_to_ptr.vmem [resolvable:$true] %s136
      %s138 = sshll.u32 %s2, 4
      %s139 = int_to_ptr.hbm [resolvable:$true] %s138
      %141 = dma.vmem_to_hbm [thread:$0]  %s137, 16, %s139, [#allocation5]
    $region37: #{tpu_custom_call.1} parent=1 // pred_fallthru
      _
    // Predicated region
    $region38: #{tpu_custom_call.1} parent=1 // pred_check
      _
    $region39: #{tpu_custom_call.1} parent=1 // pred_check_branch
      %143 = sbr.rel (0) target = $region41
    $region40: #{tpu_custom_call.1} parent=1 // pred_region
      %145 = dma.done [#allocation5], 16
    $region41: #{tpu_custom_call.1} parent=1 // pred_fallthru
      _
    %146 = vsyncpa [#allocation4], 1
    %147 = vsyncpa [#allocation7], 1
    %148 = vsyncpa [#allocation5], 1

</llo_original>
